<compile_context>
chip_gen: v5e
topology: v5e:2x2
jax: 0.10.0
libtpu: 0.0.40
codegen_flags: <defaults>
</compile_context>

<pallas_src>
import functools
import math

import jax
import jax.numpy as jnp
from jax.experimental import pallas as pl
from jax.experimental.pallas import tpu as pltpu

LANES = 128
MAX_BLOCK_ROWS = 8192          # 4 MiB f32 per input block.
MAX_ACC_ROWS = 64              # (64, 128) f32 accumulator = 8 vregs.
MIN_PALLAS_ELEMENTS = 1 << 20  # below this, XLA's fused reduce wins.


def _round_up(x, m):
    return (x + m - 1) // m * m


def _bce_with_logits(x, y):
    # Numerically stable BCE with logits: max(x,0) - x*y + log1p(exp(-|x|)).
    return jnp.maximum(x, 0.0) - x * y + jnp.log1p(jnp.exp(-jnp.abs(x)))


def _bce_mean_xla(output, target):
    x = output.astype(jnp.float32)
    y = target.astype(jnp.float32)
    return jnp.mean(_bce_with_logits(x, y))


def _bce_kernel(x_ref, y_ref, out_ref, *, block_rows, tail_rows, acc_rows):
    j = pl.program_id(0)
    last = pl.num_programs(0) - 1

    @pl.when(j == 0)
    def _():
        out_ref[...] = jnp.zeros_like(out_ref)

    x = x_ref[...].astype(jnp.float32)
    y = y_ref[...].astype(jnp.float32)
    loss = _bce_with_logits(x, y)

    def accumulate(vals):
        # (block_rows,128) -> (block_rows/acc_rows, acc_rows, 128), summed over
        # the leading dim: acc_rows/8 independent vadd chains (ILP), pure VPU.
        out_ref[...] += vals.reshape(-1, acc_rows, LANES).sum(axis=0)

    if tail_rows == block_rows:
        # Every block is fully valid: no masking anywhere.
        accumulate(loss)
    else:
        # Steady state: unmasked.
        @pl.when(j < last)
        def _():
            accumulate(loss)

        # Single ragged last block: mask its garbage rows (select blocks any
        # NaN/Inf produced from the unspecified padded rows).
        @pl.when(j == last)
        def _():
            row = jax.lax.broadcasted_iota(jnp.int32, (block_rows, LANES), 0)
            accumulate(jnp.where(row < tail_rows, loss, 0.0))


def _joints_be_loss_pallas(output, target, *, max_block_rows=MAX_BLOCK_ROWS):
    n_valid = output.size
    assert n_valid % LANES == 0
    n_rows = n_valid // LANES

    # Free (contiguous) reshape to a lane-dense 2-D slab; no HBM copy.
    x2d = output.reshape(n_rows, LANES)
    y2d = target.reshape(n_rows, LANES)

    # Row-block: biggest that fits the VMEM budget, multiple of the sublane
    # packing for the input dtype so ragged edge blocks stay layout-legal.
    sub = {4: 8, 2: 16, 1: 32}.get(jnp.dtype(output.dtype).itemsize, 8)
    block_rows = _round_up(min(max_block_rows, n_rows), sub)
    acc_rows = math.gcd(block_rows, MAX_ACC_ROWS)

    total_blocks = pl.cdiv(n_rows, block_rows)
    tail_rows = n_rows - (total_blocks - 1) * block_rows

    kernel = functools.partial(
        _bce_kernel, block_rows=block_rows, tail_rows=tail_rows,
        acc_rows=acc_rows)

    partial = pl.pallas_call(
        kernel,
        out_shape=jax.ShapeDtypeStruct((acc_rows, LANES), jnp.float32),
        grid_spec=pltpu.PrefetchScalarGridSpec(
            num_scalar_prefetch=0,
            grid=(total_blocks,),
            in_specs=[
                pl.BlockSpec((block_rows, LANES), lambda j: (j, 0)),
                pl.BlockSpec((block_rows, LANES), lambda j: (j, 0)),
            ],
            # Constant output block index -> accumulator stays VMEM-resident
            # across the whole reduction grid, written back once at the end.
            out_specs=pl.BlockSpec((acc_rows, LANES), lambda j: (0, 0)),
        ),
        compiler_params=pltpu.CompilerParams(
            dimension_semantics=("arbitrary",),
            vmem_limit_bytes=32 * 1024 * 1024,
        ),
    )(x2d, y2d)

    # Tiny final cross-lane reduce + mean normalization in XLA.
    return jnp.sum(partial) / jnp.float32(n_valid)


def joints_be_loss(output, target, target_weight=None, *,
                   min_pallas_elements=MIN_PALLAS_ELEMENTS,
                   max_block_rows=MAX_BLOCK_ROWS):
    """Mean BCE-with-logits over all elements of `output` vs `target`.

    `target_weight` is ignored, exactly like the reference PyTorch module.
    """
    assert output.shape == target.shape
    n = output.size
    # Fast path: small inputs (pallas dispatch is pure overhead) or a
    # lane-ragged element count (a 2-D re-tiling would need a full padded
    # copy of both inputs — more expensive than XLA's fused reduce).
    if n < min_pallas_elements or n % LANES != 0:
        return _bce_mean_xla(output, target)
    return _joints_be_loss_pallas(output, target, max_block_rows=max_block_rows)


if __name__ == "__main__":
    key = jax.random.PRNGKey(0)

    def make(shape, k):
        k1, k2, k3 = jax.random.split(k, 3)
        out = jax.random.normal(k1, shape, dtype=jnp.float32)
        tgt = jax.random.uniform(k2, shape, dtype=jnp.float32)   # heatmap probs
        tw = jax.random.uniform(k3, shape[:2] + (1,), dtype=jnp.float32)  # unused
        return out, tgt, tw

    ok = True

    # 1) Demo shape (B=2, K=4 joints, 16x16 heatmaps), Pallas kernel forced.
    k0, k1, k2, key = jax.random.split(key, 4)
    out, tgt, tw = make((2, 4, 16, 16), k0)
    got = jax.block_until_ready(
        joints_be_loss(out, tgt, tw, min_pallas_elements=0))
    ref = jax.block_until_ready(_bce_mean_xla(out, tgt))
    ok &= bool(jnp.allclose(got, ref, rtol=1e-5, atol=1e-6))

    # 2) Multi-block grid with an exact tail (resident accumulator across steps).
    out, tgt, tw = make((2, 8, 48, 64), k1)      # 49152 elems -> 384 rows
    got = jax.block_until_ready(
        joints_be_loss(out, tgt, tw, min_pallas_elements=0, max_block_rows=64))
    ref = jax.block_until_ready(_bce_mean_xla(out, tgt))
    ok &= bool(jnp.allclose(got, ref, rtol=1e-5, atol=1e-6))

    # 3) Multi-block grid with a ragged last row-block (masked in-kernel).
    out, tgt, tw = make((2, 7, 40, 64), k2)      # 35840 elems -> 280 rows
    got = jax.block_until_ready(
        joints_be_loss(out, tgt, tw, min_pallas_elements=0, max_block_rows=64))
    ref = jax.block_until_ready(_bce_mean_xla(out, tgt))
    ok &= bool(jnp.allclose(got, ref, rtol=1e-5, atol=1e-6))

    # 4) Default public wrapper (small input -> XLA fast path).
    out, tgt, tw = make((2, 4, 16, 16), key)
    got = jax.block_until_ready(joints_be_loss(out, tgt, tw))
    ref = jax.block_until_ready(_bce_mean_xla(out, tgt))
    ok &= bool(jnp.allclose(got, ref, rtol=1e-5, atol=1e-6))

    assert ok
    print("KERNEL_OK")
</pallas_src>

<mosaic_0001>
module attributes {stable_mosaic.version = 11 : i64} {
  func.func @_bce_kernel(%arg0: i32, %arg1: memref<16x128xf32, #tpu.memory_space<vmem>>, %arg2: memref<16x128xf32, #tpu.memory_space<vmem>>, %arg3: memref<16x128xf32, #tpu.memory_space<vmem>>) attributes {dimension_semantics = [#tpu.dimension_semantics<arbitrary>], iteration_bounds = array<i64: 1>, scalar_prefetch = 0 : i64, scratch_operands = 0 : i64, tpu.core_type = #tpu.core_type<tc>, window_params = [{transform_indices = @transform_0, window_bounds = array<i64: 16, 128>}, {transform_indices = @transform_1, window_bounds = array<i64: 16, 128>}, {pipeline_mode = #tpu.pipeline_mode<synchronous>, transform_indices = @transform_2, window_bounds = array<i64: 16, 128>}]} {
    %c0_i32 = arith.constant 0 : i32
    %0 = arith.cmpi eq, %arg0, %c0_i32 : i32
    %1 = arith.extui %0 : i1 to i32
    %c0_i32_0 = arith.constant 0 : i32
    %2 = arith.cmpi ne, %1, %c0_i32_0 : i32
    scf.if %2 {
      %cst_10 = arith.constant 0.000000e+00 : f32
      %20 = vector.broadcast %cst_10 : f32 to vector<16x128xf32>
      %c0_11 = arith.constant 0 : index
      %c0_12 = arith.constant 0 : index
      %21 = vector.load %arg3[%c0_11, %c0_12] : memref<16x128xf32, #tpu.memory_space<vmem>>, vector<16x128xf32>
      tpu.vector_store %arg3[%c0_11, %c0_12], %20 {strides = array<i32>} : memref<16x128xf32, #tpu.memory_space<vmem>>, vector<16x128xf32>,
    } else {
    }
    %c0 = arith.constant 0 : index
    %c0_1 = arith.constant 0 : index
    %3 = vector.load %arg1[%c0, %c0_1] : memref<16x128xf32, #tpu.memory_space<vmem>>, vector<16x128xf32>
    %c0_2 = arith.constant 0 : index
    %c0_3 = arith.constant 0 : index
    %4 = vector.load %arg2[%c0_2, %c0_3] : memref<16x128xf32, #tpu.memory_space<vmem>>, vector<16x128xf32>
    %cst = arith.constant 0.000000e+00 : f32
    %5 = vector.broadcast %cst : f32 to vector<16x128xf32>
    %6 = arith.maximumf %3, %5 : vector<16x128xf32>
    %7 = arith.mulf %3, %4 : vector<16x128xf32>
    %8 = arith.subf %6, %7 : vector<16x128xf32>
    %9 = math.absf %3 : vector<16x128xf32>
    %cst_4 = arith.constant 0.000000e+00 : f32
    %10 = vector.broadcast %cst_4 : f32 to vector<16x128xf32>
    %11 = arith.subf %10, %9 : vector<16x128xf32>
    %12 = math.exp %11 : vector<16x128xf32>
    %13 = math.log1p %12 : vector<16x128xf32>
    %14 = arith.addf %8, %13 : vector<16x128xf32>
    %c0_5 = arith.constant 0 : index
    %c0_6 = arith.constant 0 : index
    %15 = vector.load %arg3[%c0_5, %c0_6] : memref<16x128xf32, #tpu.memory_space<vmem>>, vector<16x128xf32>
    %16 = vector.shape_cast %14 : vector<16x128xf32> to vector<1x16x128xf32>
    %cst_7 = arith.constant dense<0.000000e+00> : vector<16x128xf32>
    %17 = vector.multi_reduction <add>, %16, %cst_7 [0] : vector<1x16x128xf32> to vector<16x128xf32>
    %18 = arith.addf %15, %17 : vector<16x128xf32>
    %c0_8 = arith.constant 0 : index
    %c0_9 = arith.constant 0 : index
    %19 = vector.load %arg3[%c0_8, %c0_9] : memref<16x128xf32, #tpu.memory_space<vmem>>, vector<16x128xf32>
    tpu.vector_store %arg3[%c0_8, %c0_9], %18 {strides = array<i32>} : memref<16x128xf32, #tpu.memory_space<vmem>>, vector<16x128xf32>,
    return
  }
  func.func @transform_0(%arg0: i32) -> (i32, i32) {
    %c0_i32 = arith.constant 0 : i32
    %c0_i32_0 = arith.constant 0 : i32
    return %arg0, %c0_i32 : i32, i32
  }
  func.func @transform_1(%arg0: i32) -> (i32, i32) {
    %c0_i32 = arith.constant 0 : i32
    %c0_i32_0 = arith.constant 0 : i32
    return %arg0, %c0_i32 : i32, i32
  }
  func.func @transform_2(%arg0: i32) -> (i32, i32) {
    %c0_i32 = arith.constant 0 : i32
    %c0_i32_0 = arith.constant 0 : i32
    %c0_i32_1 = arith.constant 0 : i32
    return %c0_i32, %c0_i32_0 : i32, i32
  }
}

</mosaic_0001>

<llo_original>
// kernel: tpu_custom_call.1
$region0: #{tpu_custom_call.1}
  #allocation0 [shape = 'u32[]', space=smem, size = 0x4, offset = 0x4, fixed_abs, tag = 'smem constant byte address 0x4 - core index']
  #allocation1 [shape = 'u32[72,128]{1,0:T(1,128)}', space=vmem, size = 0x9000, scoped, tag = 'internal scratch']
  %s0 = inlined_call_operand.hbm [shape: f32[16,128], index: 0, kind: input, shape index: {}]
  %s1 = inlined_call_operand.hbm [shape: f32[16,128], index: 1, kind: input, shape index: {}]
  %s2 = inlined_call_operand.hbm [shape: f32[16,128], index: 2, kind: output, shape index: {}]
  %s3 = sld [smem:[#allocation0]]
  $region30: #{tpu_custom_call.1} parent=0
    _
  %s5 = ssub.s32 1, %s3
  %s6 = scalar_select 0, %s5, %s3
  $region1: #{tpu_custom_call.1} parent=0
    #allocation2 [shape = 'u8[8192]{0}', space=vmem, size = 0x2000, scoped, tag = 'input window, operand 0, single buffered']
    #allocation3 [shape = 's32[1]{0}', space=sflag, size = 0x4, scoped, tag = 'scoped memory for tpu_custom_call.1']
    #allocation4 [shape = 's32[1]{0}', space=sflag, size = 0x4, scoped, tag = 'scoped memory for tpu_custom_call.1']
    #allocation5 [shape = 'u8[8192]{0}', space=vmem, size = 0x2000, scoped, tag = 'input window, operand 1, single buffered']
    #allocation6 [shape = 's32[1]{0}', space=sflag, size = 0x4, scoped, tag = 'scoped memory for tpu_custom_call.1']
    #allocation7 [shape = 'u8[8192]{0}', space=vmem, size = 0x2000, scoped, tag = 'output window, operand 0, single buffered']
    %7 = vsyncpa [#allocation3], 0
    %8 = vsyncpa [#allocation6], 0
    %9 = vsyncpa [#allocation4], 0
    // Predicated region
    $region2: #{tpu_custom_call.1} parent=1 // pred_check
      _
    $region3: #{tpu_custom_call.1} parent=1 // pred_check_branch
      %11 = sbr.rel (0) target = $region5
    $region4: #{tpu_custom_call.1} parent=1 // pred_region
      %13 = vsyncadd [#allocation3], 0
      %s14 = sshll.u32 %s0, 4
      %s15 = int_to_ptr.hbm [resolvable:$true] %s14
      %s16 = sshll.u32 [#allocation2], 4
      %s17 = int_to_ptr.vmem [resolvable:$true] %s16
      %22 = dma.hbm_to_vmem [thread:$0]  %s15, 256, %s17, [#allocation3], 128, 128, 8
    $region5: #{tpu_custom_call.1} parent=1 // pred_fallthru
      _
    // Predicated region
    $region6: #{tpu_custom_call.1} parent=1 // pred_check
      _
    $region7: #{tpu_custom_call.1} parent=1 // pred_check_branch
      %24 = sbr.rel (0) target = $region9
    $region8: #{tpu_custom_call.1} parent=1 // pred_region
      %26 = vsyncadd [#allocation6], 0
      %s27 = sshll.u32 %s1, 4
      %s28 = int_to_ptr.hbm [resolvable:$true] %s27
      %s29 = sshll.u32 [#allocation5], 4
      %s30 = int_to_ptr.vmem [resolvable:$true] %s29
      %35 = dma.hbm_to_vmem [thread:$0]  %s28, 256, %s30, [#allocation6], 128, 128, 8
    $region9: #{tpu_custom_call.1} parent=1 // pred_fallthru
      _
    // Predicated region
    $region10: #{tpu_custom_call.1} parent=1 // pred_check
      _
    $region11: #{tpu_custom_call.1} parent=1 // pred_check_branch
      %37 = sbr.rel (0) target = $region13
    $region12: #{tpu_custom_call.1} parent=1 // pred_region
      %39 = dma.done [#allocation3], 256
    $region13: #{tpu_custom_call.1} parent=1 // pred_fallthru
      _
    // Predicated region
    $region14: #{tpu_custom_call.1} parent=1 // pred_check
      _
    $region15: #{tpu_custom_call.1} parent=1 // pred_check_branch
      %41 = sbr.rel (0) target = $region17
    $region16: #{tpu_custom_call.1} parent=1 // pred_region
      %43 = dma.done [#allocation6], 256
    $region17: #{tpu_custom_call.1} parent=1 // pred_fallthru
      _
    %p44 = scmp.eq.s32.totalorder 0, 0
    // Predicated region
    $region18: #{tpu_custom_call.1} parent=1 // pred_check
      %p45 = pneg %p44
    $region19: #{tpu_custom_call.1} parent=1 // pred_check_branch
      %47 = sbr.rel (%p45) target = $region21
    $region20: #{tpu_custom_call.1} parent=1 // pred_region
      %48 = vst [vmem:[#allocation7] sm:$0xff] 0.0
      %49 = vst [vmem:[#allocation7 + $0x8] sm:$0xff] 0.0
    $region21: #{tpu_custom_call.1} parent=1 // pred_fallthru
      _
    %v50 = vld [vmem:[#allocation2] sm:$0xff]
    %v51 = vld [vmem:[#allocation2 + $0x8] sm:$0xff]
    %v52 = vld [vmem:[#allocation5] sm:$0xff]
    %v53 = vld [vmem:[#allocation5 + $0x8] sm:$0xff]
    %v54 = vmax.f32 %v50, 0.0
    %v55 = vmax.f32 %v51, 0.0
    %v56 = vmul.f32 %v50, %v52
    %v57 = vmul.f32 %v51, %v53
    %v58 = vsub.f32 %v54, %v56
    %v59 = vsub.f32 %v55, %v57
    %v60 = vand.u32 2147483647, %v50
    %v61 = vand.u32 2147483647, %v51
    %v62 = vsub.f32 0.0, %v60
    %v63 = vsub.f32 0.0, %v61
    %v64 = vmul.f32 %v62, 1.442695
    %v65 = vpow.pop %v64
    %v66 = vmul.f32 %v63, 1.442695
    %v67 = vpow.pop %v66
    %v68 = vadd.f32 %v65, 1.0
    %v69 = vlog2.pop %v68
    %v70 = vmul.f32 %v69, 0.6931472
    %v71 = vmul.f32 -0.5, %v65
    %v72 = vadd.f32 %v71, 1.0
    %v73 = vmul.f32 %v72, %v65
    %v74 = vand.u32 2147483647, %v65
    %vm75 = vcmp.lt.f32.partialorder %v74, 0.0004427343
    %v76 = vsel %vm75, %v73, %v70
    %v77 = vadd.f32 %v67, 1.0
    %v78 = vlog2.pop %v77
    %v79 = vmul.f32 %v78, 0.6931472
    %v80 = vmul.f32 -0.5, %v67
    %v81 = vadd.f32 %v80, 1.0
    %v82 = vmul.f32 %v81, %v67
    %v83 = vand.u32 2147483647, %v67
    %vm84 = vcmp.lt.f32.partialorder %v83, 0.0004427343
    %v85 = vsel %vm84, %v82, %v79
    %v86 = vadd.f32 %v58, %v76
    %v87 = vadd.f32 %v59, %v85
    %v88 = vld [vmem:[#allocation7] sm:$0xff]
    %v89 = vld [vmem:[#allocation7 + $0x8] sm:$0xff]
    %v90 = vadd.f32 %v86, 0.0
    %v91 = vadd.f32 %v87, 0.0
    %v92 = vadd.f32 %v88, %v90
    %v93 = vadd.f32 %v89, %v91
    %94 = vst [vmem:[#allocation7] sm:$0xff] %v92
    %95 = vst [vmem:[#allocation7 + $0x8] sm:$0xff] %v93
    // Predicated region
    $region22: #{tpu_custom_call.1} parent=1 // pred_check
      _
    $region23: #{tpu_custom_call.1} parent=1 // pred_check_branch
      %97 = sbr.rel (0) target = $region25
    $region24: #{tpu_custom_call.1} parent=1 // pred_region
      %99 = vsyncadd [#allocation4], 0
      %s100 = sshll.u32 [#allocation7], 4
      %s101 = int_to_ptr.vmem [resolvable:$true] %s100
      %s102 = sshll.u32 %s2, 4
      %s103 = int_to_ptr.hbm [resolvable:$true] %s102
      %108 = dma.vmem_to_hbm [thread:$0]  %s101, 256, %s103, [#allocation4], 128, 128, 8
    $region25: #{tpu_custom_call.1} parent=1 // pred_fallthru
      _
    // Predicated region
    $region26: #{tpu_custom_call.1} parent=1 // pred_check
      _
    $region27: #{tpu_custom_call.1} parent=1 // pred_check_branch
      %110 = sbr.rel (0) target = $region29
    $region28: #{tpu_custom_call.1} parent=1 // pred_region
      %112 = dma.done [#allocation4], 256
    $region29: #{tpu_custom_call.1} parent=1 // pred_fallthru
      _
    %113 = vsyncpa [#allocation3], 1
    %114 = vsyncpa [#allocation6], 1
    %115 = vsyncpa [#allocation4], 1

</llo_original>
